<compile_context>
chip_gen: v6e
topology: v6e:2x2x1
jax: 0.10.0
libtpu: 0.0.40
codegen_flags: <defaults>
</compile_context>

<pallas_src>
import functools

import jax
import jax.numpy as jnp
from jax.experimental import pallas as pl
from jax.experimental.pallas import tpu as pltpu


def _shifted_softplus_kernel(x_ref, o_ref, *, beta, threshold):
    # Elementwise hot path: VPU for sub/cmp/select/min, EUP for exp/log1p.
    x = x_ref[...].astype(jnp.float32)
    xm1 = x - 1.0                                   # PyTorch passes (x - 1) to softplus
    if beta == 1.0:
        z = xm1
    else:
        z = jnp.float32(beta) * xm1
    # Clamp the non-taken branch so exp() never overflows (torch semantics preserved).
    sp = jnp.log1p(jnp.exp(jnp.minimum(z, jnp.float32(threshold))))
    if beta != 1.0:
        sp = sp * jnp.float32(1.0 / beta)
    # torch.softplus returns the (shifted) input unchanged when beta*input > threshold.
    out = jnp.where(z > jnp.float32(threshold), xm1, sp)
    o_ref[...] = out.astype(o_ref.dtype)


def _chip_tuning():
    """(target block bytes, vmem_limit_bytes, want_even_grid) per TPU generation."""
    kind = ""
    try:
        kind = jax.devices()[0].device_kind.lower()
    except Exception:
        pass
    if "v7" in kind:
        # 3.2 TB/s HBM, 2 TCs/chip, 64 MiB physical VMEM: big blocks + even parallel grid.
        return 8 * 1024 * 1024, 40 * 1024 * 1024, True
    if "v6" in kind:
        return 4 * 1024 * 1024, 32 * 1024 * 1024, False
    # v5e / v5p / unknown: conservative — v5e default scoped VMEM is 16 MiB and 2 MiB
    # blocks already fully amortize the per-step overhead at ~0.82 TB/s.
    return 2 * 1024 * 1024, 16 * 1024 * 1024, False


def _pick_block(total, align, max_per_block, want_even):
    """Pick a block length (multiple of `align`) covering `total` rows/units.

    If `want_even`, the resulting grid length pl.cdiv(total, block) is forced to be
    >= 2 and even whenever a split is possible (keeps both v7x TensorCores balanced).
    """
    max_per_block = max(align, (max_per_block // align) * align)
    split = total > max_per_block or (want_even and total > align)
    if not split:
        return total                      # single block == full dim (any size allowed)
    nb = pl.cdiv(total, max_per_block)
    if want_even:
        nb = max(nb, 2)
        if nb % 2:
            nb += 1
    blk = pl.cdiv(pl.cdiv(total, nb), align) * align
    if want_even:
        # Nudge down (bounded) if rounding re-introduced an odd grid.
        while blk > align and pl.cdiv(total, blk) % 2 == 1:
            blk -= align
    return blk


def shifted_softplus(x, beta: float = 1.0, threshold: float = 20.0):
    """Pallas TPU implementation of ShiftedSoftplus.forward."""
    orig_shape = x.shape
    dtype = x.dtype
    itemsize = jnp.dtype(dtype).itemsize
    n = int(x.size)
    if n == 0:
        return x

    block_bytes_target, vmem_limit, want_even = _chip_tuning()
    # Sublane packing (rows per vreg) depends on element width; other widths fall back
    # to 8 (still correct, just conservative alignment).
    sublane = {4: 8, 2: 16, 1: 32}.get(itemsize, 8)

    kernel = functools.partial(
        _shifted_softplus_kernel, beta=float(beta), threshold=float(threshold)
    )
    cost = pl.CostEstimate(
        flops=5 * n, transcendentals=2 * n, bytes_accessed=2 * n * itemsize
    )
    cparams = pltpu.CompilerParams(
        dimension_semantics=("parallel",),   # shardable across v7x's 2 TCs; no-op on 1-TC chips
        vmem_limit_bytes=int(vmem_limit),
    )

    flat = x.reshape(-1)

    # ---- preferred path: lane-dense 2-D (rows, W) view when some W (multiple of 128)
    # ---- divides n exactly — no padding, no extra copies.
    W = 0
    for cand in (2048, 1024, 512, 256, 128):
        if n % cand == 0:
            W = cand
            break

    if W:
        rows = n // W
        max_rows = max(sublane, (block_bytes_target // (W * itemsize)))
        block_r = _pick_block(rows, sublane, max_rows, want_even)
        grid = (pl.cdiv(rows, block_r),)
        x2 = flat.reshape(rows, W)
        out = pl.pallas_call(
            kernel,
            out_shape=jax.ShapeDtypeStruct((rows, W), dtype),
            grid=grid,
            in_specs=[pl.BlockSpec((block_r, W), lambda i: (i, 0))],
            out_specs=pl.BlockSpec((block_r, W), lambda i: (i, 0)),
            compiler_params=cparams,
            cost_estimate=cost,
        )(x2)
        return out.reshape(orig_shape)

    # ---- awkward sizes (n not a multiple of 128): run directly on the flat 1-D array.
    # Blocks are multiples of sublane*128; the partial last block is clipped/masked by
    # Pallas, so there is NO jnp.pad copy in and NO trailing-slice copy out.
    unit = sublane * 128
    ceil_units = pl.cdiv(n, unit)
    max_units = max(1, block_bytes_target // (unit * itemsize))
    block_units = _pick_block(ceil_units, 1, max_units, want_even)
    if block_units >= ceil_units:
        block_n = n                       # single block equal to the full (ragged) dim
    else:
        block_n = block_units * unit      # multiple of 128 and provably <= n
    grid = (pl.cdiv(n, block_n),)
    out = pl.pallas_call(
        kernel,
        out_shape=jax.ShapeDtypeStruct((n,), dtype),
        grid=grid,
        in_specs=[pl.BlockSpec((block_n,), lambda i: (i,))],
        out_specs=pl.BlockSpec((block_n,), lambda i: (i,)),
        compiler_params=cparams,
        cost_estimate=cost,
    )(flat)
    return out.reshape(orig_shape)


def _reference(x, beta: float = 1.0, threshold: float = 20.0):
    # Pure-JAX reference mirroring torch.nn.functional.softplus(x - 1, beta, threshold).
    xm1 = x.astype(jnp.float32) - 1.0
    z = beta * xm1
    sp = jnp.log1p(jnp.exp(jnp.minimum(z, threshold))) / beta
    return jnp.where(z > threshold, xm1, sp).astype(x.dtype)


if __name__ == "__main__":
    key = jax.random.PRNGKey(0)

    # NCHW input, as the module would see from a conv stack (128-aligned, 2-D path).
    x = jax.random.normal(key, (2, 4, 16, 16), dtype=jnp.float32) * 10.0
    y = jax.block_until_ready(shifted_softplus(x, beta=1, threshold=20))
    y_ref = _reference(x, 1.0, 20.0)
    assert y.shape == x.shape and y.dtype == x.dtype
    assert jnp.allclose(y, y_ref, atol=1e-5, rtol=1e-5), "mismatch vs reference (f32)"

    # Awkward (non-128-aligned) shape + non-unit beta: exercises the copy-free 1-D path.
    x2 = jax.random.normal(jax.random.fold_in(key, 1), (3, 5, 7), dtype=jnp.float32) * 10.0
    y2 = jax.block_until_ready(shifted_softplus(x2, beta=2, threshold=20))
    y2_ref = _reference(x2, 2.0, 20.0)
    assert y2.shape == x2.shape
    assert jnp.allclose(y2, y2_ref, atol=1e-5, rtol=1e-5), "mismatch vs reference (beta=2)"

    # bf16 path: HBM traffic stays bf16, compute upcast to f32 inside the kernel.
    x3 = jax.random.normal(jax.random.fold_in(key, 2), (2, 4, 16, 16), dtype=jnp.bfloat16)
    y3 = jax.block_until_ready(shifted_softplus(x3))
    y3_ref = _reference(x3, 1.0, 20.0)
    assert y3.dtype == x3.dtype
    assert jnp.allclose(
        y3.astype(jnp.float32), y3_ref.astype(jnp.float32), atol=2e-2, rtol=2e-2
    ), "mismatch vs reference (bf16)"

    print("KERNEL_OK")
</pallas_src>

<mosaic_0001>
module attributes {stable_mosaic.version = 11 : i64} {
  func.func @_shifted_softplus_kernel(%arg0: i32, %arg1: memref<1x2048xf32, #tpu.memory_space<vmem>>, %arg2: memref<1x2048xf32, #tpu.memory_space<vmem>>) attributes {dimension_semantics = [#tpu.dimension_semantics<parallel>], iteration_bounds = array<i64: 1>, scalar_prefetch = 0 : i64, scratch_operands = 0 : i64, tpu.core_type = #tpu.core_type<tc>, window_params = [{transform_indices = @transform_0, window_bounds = array<i64: 1, 2048>}, {transform_indices = @transform_1, window_bounds = array<i64: 1, 2048>}]} {
    %c0 = arith.constant 0 : index
    %c0_0 = arith.constant 0 : index
    %0 = vector.load %arg1[%c0, %c0_0] : memref<1x2048xf32, #tpu.memory_space<vmem>>, vector<1x2048xf32>
    %cst = arith.constant 1.000000e+00 : f32
    %1 = vector.broadcast %cst : f32 to vector<1x2048xf32>
    %2 = arith.subf %0, %1 : vector<1x2048xf32>
    %cst_1 = arith.constant 2.000000e+01 : f32
    %3 = vector.broadcast %cst_1 : f32 to vector<1x2048xf32>
    %4 = arith.minimumf %2, %3 : vector<1x2048xf32>
    %5 = math.exp %4 : vector<1x2048xf32>
    %6 = math.log1p %5 : vector<1x2048xf32>
    %cst_2 = arith.constant 2.000000e+01 : f32
    %7 = vector.broadcast %cst_2 : f32 to vector<1x2048xf32>
    %8 = arith.cmpf ogt, %2, %7 : vector<1x2048xf32>
    %9 = arith.select %8, %2, %6 : vector<1x2048xi1>, vector<1x2048xf32>
    %c0_3 = arith.constant 0 : index
    %c0_4 = arith.constant 0 : index
    %10 = vector.load %arg2[%c0_3, %c0_4] : memref<1x2048xf32, #tpu.memory_space<vmem>>, vector<1x2048xf32>
    tpu.vector_store %arg2[%c0_3, %c0_4], %9 {strides = array<i32>} : memref<1x2048xf32, #tpu.memory_space<vmem>>, vector<1x2048xf32>,
    return
  }
  func.func @transform_0(%arg0: i32) -> (i32, i32) {
    %c0_i32 = arith.constant 0 : i32
    %c0_i32_0 = arith.constant 0 : i32
    return %arg0, %c0_i32 : i32, i32
  }
  func.func @transform_1(%arg0: i32) -> (i32, i32) {
    %c0_i32 = arith.constant 0 : i32
    %c0_i32_0 = arith.constant 0 : i32
    return %arg0, %c0_i32 : i32, i32
  }
}

</mosaic_0001>

<llo_original>
// kernel: tpu_custom_call.1
$region0: #{tpu_custom_call.1}
  #allocation0 [shape = 'u32[]', space=smem, size = 0x4, offset = 0x4, fixed_abs, tag = 'smem constant byte address 0x4 - core index']
  #allocation1 [shape = 'u32[144,128]{1,0:T(1,128)}', space=vmem, size = 0x12000, scoped, tag = 'internal scratch']
  %s0 = inlined_call_operand.hbm [shape: f32[1,2048], index: 0, kind: input, shape index: {}]
  %s1 = inlined_call_operand.hbm [shape: f32[1,2048], index: 1, kind: output, shape index: {}]
  %s2 = sld [smem:[#allocation0]]
  $region18: #{tpu_custom_call.1} parent=0
    _
  %s4 = ssub.s32 1, %s2
  %s5 = scalar_select 0, %s4, %s2
  $region1: #{tpu_custom_call.1} parent=0
    #allocation2 [shape = 'u8[8192]{0}', space=vmem, size = 0x2000, scoped, tag = 'input window, operand 0, single buffered']
    #allocation3 [shape = 's32[1]{0}', space=sflag, size = 0x4, scoped, tag = 'scoped memory for tpu_custom_call.1']
    #allocation4 [shape = 's32[1]{0}', space=sflag, size = 0x4, scoped, tag = 'scoped memory for tpu_custom_call.1']
    #allocation5 [shape = 'u8[8192]{0}', space=vmem, size = 0x2000, scoped, tag = 'output window, operand 0, single buffered']
    %6 = vsyncpa [#allocation3], 0
    %7 = vsyncpa [#allocation4], 0
    // Predicated region
    $region2: #{tpu_custom_call.1} parent=1 // pred_check
      _
    $region3: #{tpu_custom_call.1} parent=1 // pred_check_branch
      %9 = sbr.rel (0) target = $region5
    $region4: #{tpu_custom_call.1} parent=1 // pred_region
      %s11 = ssub.s32 256, 256
      %12 = vsyncadd [#allocation3], %s11
      %s14 = sshll.u32 [#allocation2], 4
      %s15 = int_to_ptr.vmem [resolvable:$true] %s14
      %17 = dma.hbm_to_vmem [thread:$0]  %s0, 256, %s15, [#allocation3]
    $region5: #{tpu_custom_call.1} parent=1 // pred_fallthru
      _
    // Predicated region
    $region6: #{tpu_custom_call.1} parent=1 // pred_check
      _
    $region7: #{tpu_custom_call.1} parent=1 // pred_check_branch
      %19 = sbr.rel (0) target = $region9
    $region8: #{tpu_custom_call.1} parent=1 // pred_region
      %20 = dma.done [#allocation3], 256
    $region9: #{tpu_custom_call.1} parent=1 // pred_fallthru
      _
    %v21 = vld [vmem:[#allocation2] sm:$0xff]
    %v22 = vld [vmem:[#allocation2 + $0x8] sm:$0xff]
    %v23 = vsub.f32 %v21, 1.0
    %v24 = vsub.f32 %v22, 1.0
    %v25 = vmin.f32 %v23, 20.0
    %v26 = vmin.f32 %v24, 20.0
    %v27 = vmul.f32 %v25, 1.442695
    %v28 = vpow.pop %v27
    %v29 = vmul.f32 %v26, 1.442695
    %v30 = vpow.pop %v29
    %v31 = vadd.f32 %v28, 1.0
    %v32 = vlog2.pop %v31
    %v33 = vmul.f32 %v32, 0.6931472
    %v34 = vmul.f32 -0.5, %v28
    %v35 = vadd.f32 %v34, 1.0
    %v36 = vmul.f32 %v35, %v28
    %v37 = vand.u32 2147483647, %v28
    %vm38 = vcmp.lt.f32.partialorder %v37, 0.0004427343
    %v39 = vsel %vm38, %v36, %v33
    %v40 = vadd.f32 %v30, 1.0
    %v41 = vlog2.pop %v40
    %v42 = vmul.f32 %v41, 0.6931472
    %v43 = vmul.f32 -0.5, %v30
    %v44 = vadd.f32 %v43, 1.0
    %v45 = vmul.f32 %v44, %v30
    %v46 = vand.u32 2147483647, %v30
    %vm47 = vcmp.lt.f32.partialorder %v46, 0.0004427343
    %v48 = vsel %vm47, %v45, %v42
    %vm49 = vcmp.gt.f32.partialorder %v23, 20.0
    %vm50 = vcmp.gt.f32.partialorder %v24, 20.0
    %v51 = vsel %vm49, %v23, %v39
    %v52 = vsel %vm50, %v24, %v48
    %53 = vst [vmem:[#allocation5] sm:$0xff] %v51
    %54 = vst [vmem:[#allocation5 + $0x8] sm:$0xff] %v52
    // Predicated region
    $region10: #{tpu_custom_call.1} parent=1 // pred_check
      _
    $region11: #{tpu_custom_call.1} parent=1 // pred_check_branch
      %56 = sbr.rel (0) target = $region13
    $region12: #{tpu_custom_call.1} parent=1 // pred_region
      %s58 = ssub.s32 256, 256
      %59 = vsyncadd [#allocation4], %s58
      %s61 = sshll.u32 [#allocation5], 4
      %s62 = int_to_ptr.vmem [resolvable:$true] %s61
      %64 = dma.vmem_to_hbm [thread:$0]  %s62, 256, %s1, [#allocation4]
    $region13: #{tpu_custom_call.1} parent=1 // pred_fallthru
      _
    // Predicated region
    $region14: #{tpu_custom_call.1} parent=1 // pred_check
      _
    $region15: #{tpu_custom_call.1} parent=1 // pred_check_branch
      %66 = sbr.rel (0) target = $region17
    $region16: #{tpu_custom_call.1} parent=1 // pred_region
      %67 = dma.done [#allocation4], 256
    $region17: #{tpu_custom_call.1} parent=1 // pred_fallthru
      _
    %68 = vsyncpa [#allocation3], 1
    %69 = vsyncpa [#allocation4], 1

</llo_original>
